<compile_context>
chip_gen: v5e
topology: v5e:2x2
jax: 0.10.0
libtpu: 0.0.40
codegen_flags: <defaults>
</compile_context>

<pallas_src>
import jax
import jax.numpy as jnp
from jax.experimental import pallas as pl
from jax.experimental.pallas import tpu as pltpu  # noqa: F401  (TPU backend)

# ---- TransformerArgs (small, consistent with the module) -------------------
DIM = 32            # args.dim
HEAD_DIM = 8        # args.head_dim
N_HEADS = 4         # args.n_heads
N_KV_HEADS = 2      # args.n_kv_heads
HIDDEN_DIM = 64     # args.hidden_dim
NORM_EPS = 1e-5     # args.norm_eps
ROPE_THETA = 10000.0
REPEATS = N_HEADS // N_KV_HEADS
SCALE = HEAD_DIM ** (-0.5)
QDIM = N_HEADS * HEAD_DIM       # 32
KVDIM = N_KV_HEADS * HEAD_DIM   # 16

B = 2               # batch
L = 8               # sequence length
BL = B * L


# ---------------------------- kernel helpers --------------------------------
def _gelu_tanh(x):
    # torch.nn.GELU(approximate='tanh')
    c = 0.7978845608028654  # sqrt(2/pi)
    return 0.5 * x * (1.0 + jnp.tanh(c * (x + 0.044715 * x * x * x)))


# ------------------------------ Pallas kernel -------------------------------
def transformer_block_kernel(
    x_ref, cos_ref, sin_ref, swap_ref, mask_ref, nscale_ref,
    wqkv_ref, wo_ref, wgu_ref, wd_ref,
    out_ref, k_out_ref, v_out_ref,
):
    f32 = jnp.float32
    bf16 = jnp.bfloat16

    x = x_ref[...]               # (BL, D) f32
    nscale = nscale_ref[...]     # (4, D) f32, rows = (1 + norm_weight), pre-hoisted

    def rmsnorm(v, row):
        ms = jnp.mean(v * v, axis=-1, keepdims=True)
        return v * jax.lax.rsqrt(ms + NORM_EPS) * nscale[row:row + 1, :]

    # ---------------- attention ----------------
    xn = rmsnorm(x, 0)                       # input_layernorm (f32)
    xn_b = xn.astype(bf16)

    # fused QKV projection: one (BL, D) @ (D, QDIM + 2*KVDIM) matmul
    qkv = jnp.dot(xn_b, wqkv_ref[...], preferred_element_type=f32)   # (BL, 64)
    q = qkv[:, :QDIM]                        # (BL, 32)
    k = qkv[:, QDIM:QDIM + KVDIM]            # (BL, 16)
    v = qkv[:, QDIM + KVDIM:]                # (BL, 16)

    # RoPE: y = x*cos + (x @ S)*sin with S the signed pair-swap matrix
    # ((x@S)[2i] = -x[2i+1], (x@S)[2i+1] = x[2i])  ==  per-position 2x2 rotation.
    cosq = cos_ref[...]                      # (BL, QDIM)
    sinq = sin_ref[...]                      # (BL, QDIM)
    swap = swap_ref[...]                     # (QDIM, QDIM) bf16 (+/-1, exact)
    q_sw = jnp.dot(q.astype(bf16), swap, preferred_element_type=f32)
    k_sw = jnp.dot(k.astype(bf16), swap[:KVDIM, :KVDIM], preferred_element_type=f32)
    q_rot = q * cosq + q_sw * sinq                           # (BL, 32)
    k_rot = k * cosq[:, :KVDIM] + k_sw * sinq[:, :KVDIM]     # (BL, 16)

    # lane-dense cache outputs; GQA repeat + head transpose happen in the wrapper
    k_out_ref[...] = k_rot
    v_out_ref[...] = v

    # scores / softmax / PV per query head; K/V were computed once per KV head.
    # mask is the (BL, BL) block-diagonal causal mask (cross-batch = -1e9), so a
    # single flattened-token score matrix per head stays batch-correct.
    mask = mask_ref[...]
    o_heads = []
    for h in range(N_HEADS):
        kv = h // REPEATS
        q_h = q_rot[:, h * HEAD_DIM:(h + 1) * HEAD_DIM].astype(bf16)
        k_h = k_rot[:, kv * HEAD_DIM:(kv + 1) * HEAD_DIM].astype(bf16)
        v_h = v[:, kv * HEAD_DIM:(kv + 1) * HEAD_DIM].astype(bf16)
        s = jax.lax.dot_general(q_h, k_h, (((1,), (1,)), ((), ())),
                                preferred_element_type=f32) * SCALE   # (BL, BL)
        s = s + mask
        s = s - jnp.max(s, axis=-1, keepdims=True)
        p = jnp.exp(s)
        p = p * pl.reciprocal(jnp.sum(p, axis=-1, keepdims=True), approx=True)
        o_heads.append(jnp.dot(p.astype(bf16), v_h, preferred_element_type=f32))

    o_cat = jnp.concatenate(o_heads, axis=-1).astype(bf16)            # (BL, 32)
    attn = jnp.dot(o_cat, wo_ref[...], preferred_element_type=f32)    # (BL, D)

    h_res = x + rmsnorm(attn, 1)             # residual + post_attention_layernorm

    # ---------------- MLP (fused gate|up) ----------------
    hn_b = rmsnorm(h_res, 2).astype(bf16)    # pre_feedforward_layernorm
    gu = jnp.dot(hn_b, wgu_ref[...], preferred_element_type=f32)      # (BL, 2*H)
    g = gu[:, :HIDDEN_DIM]
    u = gu[:, HIDDEN_DIM:]
    ff_in = (_gelu_tanh(g) * u).astype(bf16)
    ff = jnp.dot(ff_in, wd_ref[...], preferred_element_type=f32)      # (BL, D)

    out_ref[...] = h_res + rmsnorm(ff, 3)    # residual + post_feedforward_layernorm


# ------------------------------- wrapper -------------------------------------
def transformer_block(x, mask, params):
    """x: (B, L, DIM) f32, mask: (L, L) additive causal mask.
    params use the same layout as before (weights already transposed so that
    y = x @ w_t)."""
    (w_in, w_postattn, w_preff, w_postff,
     wq_t, wk_t, wv_t, wo_t, wg_t, wu_t, wd_t) = params
    bf16 = jnp.bfloat16

    # ---- one-time packing (in a real model this is pre-packed per layer) ----
    norm_scale = 1.0 + jnp.concatenate([w_in, w_postattn, w_preff, w_postff],
                                       axis=0)                       # (4, D)
    w_qkv = jnp.concatenate([wq_t, wk_t, wv_t], axis=1).astype(bf16)  # (D, 64)
    w_gu = jnp.concatenate([wg_t, wu_t], axis=1).astype(bf16)         # (D, 2H)
    wo_b = wo_t.astype(bf16)                                          # (32, D)
    wd_b = wd_t.astype(bf16)                                          # (H, D)

    # ---- RoPE cos/sin tables, pair-expanded, tiled to (B*L, QDIM) ----
    pos = jnp.arange(L, dtype=jnp.float32)
    inv_freq = ROPE_THETA ** (-2.0 * jnp.arange(HEAD_DIM // 2, dtype=jnp.float32)
                              / HEAD_DIM)
    m_theta = pos[:, None] * inv_freq[None, :]                        # (L, Dh/2)
    cos = jnp.repeat(jnp.cos(m_theta), 2, axis=-1)                    # (L, Dh)
    sin = jnp.repeat(jnp.sin(m_theta), 2, axis=-1)                    # (L, Dh)
    cos_q = jnp.tile(cos, (B, N_HEADS))                               # (B*L, QDIM)
    sin_q = jnp.tile(sin, (B, N_HEADS))

    # signed pair-swap matrix: (x @ S)[2i] = -x[2i+1], (x @ S)[2i+1] = x[2i]
    half = jnp.arange(QDIM // 2)
    S = jnp.zeros((QDIM, QDIM), jnp.float32)
    S = S.at[2 * half + 1, 2 * half].set(-1.0)
    S = S.at[2 * half, 2 * half + 1].set(1.0)
    S = S.astype(bf16)

    # block-diagonal causal mask over the flattened (B*L) token axis
    bidx = jnp.arange(BL) // L
    same_batch = bidx[:, None] == bidx[None, :]
    mask_big = jnp.where(same_batch, jnp.tile(mask, (B, B)), -1000000000.0)

    x2d = x.reshape(BL, DIM)

    # Single invocation (no grid): every operand is tiny, so the whole problem
    # lives in VMEM as full-array blocks (default BlockSpecs).
    out2d, k2d, v2d = pl.pallas_call(
        transformer_block_kernel,
        out_shape=(
            jax.ShapeDtypeStruct((BL, DIM), jnp.float32),
            jax.ShapeDtypeStruct((BL, KVDIM), jnp.float32),
            jax.ShapeDtypeStruct((BL, KVDIM), jnp.float32),
        ),
    )(x2d, cos_q, sin_q, S, mask_big, norm_scale, w_qkv, wo_b, w_gu, wd_b)

    out = out2d.reshape(B, L, DIM)
    # GQA repeat + (B, n_heads, L, head_dim) layout done on the XLA side so the
    # kernel's K/V stores stay lane-dense (single (BL,16) store each).
    k = k2d.reshape(B, L, N_KV_HEADS, HEAD_DIM).transpose(0, 2, 1, 3)
    v = v2d.reshape(B, L, N_KV_HEADS, HEAD_DIM).transpose(0, 2, 1, 3)
    k = jnp.repeat(k, REPEATS, axis=1)
    v = jnp.repeat(v, REPEATS, axis=1)
    return out, k, v


# ----------------------- glue: mask / rotation matrix ------------------------
def make_causal_mask(context_len):
    idx = jnp.arange(context_len)
    return (idx[:, None] < idx[None, :]).astype(jnp.float32) * -1000000000.0


def make_rotation_matrix(seq_len, embedding_dim, rope_theta):
    positions = jnp.arange(seq_len, dtype=jnp.float32)
    si = jnp.arange(embedding_dim // 2)
    theta = rope_theta ** (-2.0 * si.astype(jnp.float32) / embedding_dim)
    m_theta = positions[:, None] * theta[None, :]
    cosv, sinv = jnp.cos(m_theta), jnp.sin(m_theta)
    R = jnp.zeros((seq_len, embedding_dim, embedding_dim), jnp.float32)
    R = R.at[:, 2 * si, 2 * si].set(cosv)
    R = R.at[:, 2 * si, 2 * si + 1].set(-sinv)
    R = R.at[:, 2 * si + 1, 2 * si].set(sinv)
    R = R.at[:, 2 * si + 1, 2 * si + 1].set(cosv)
    return R


# ------------------------- pure-JAX reference check --------------------------
def reference_block(x, rot, mask, params):
    (w_in, w_postattn, w_preff, w_postff,
     wq_t, wk_t, wv_t, wo_t, wg_t, wu_t, wd_t) = params

    def rms(v, w):
        ms = jnp.mean(v * v, axis=-1, keepdims=True)
        return (v * jax.lax.rsqrt(ms + NORM_EPS)) * (1.0 + w)

    xn = rms(x, w_in)
    q = xn @ wq_t
    k = xn @ wk_t
    v = xn @ wv_t
    q = q.reshape(B, L, N_HEADS, HEAD_DIM).transpose(0, 2, 1, 3)
    k = k.reshape(B, L, N_KV_HEADS, HEAD_DIM).transpose(0, 2, 1, 3)
    v = v.reshape(B, L, N_KV_HEADS, HEAD_DIM).transpose(0, 2, 1, 3)
    k = jnp.repeat(k, REPEATS, axis=1)
    v = jnp.repeat(v, REPEATS, axis=1)
    q = jnp.einsum('bhlj,lij->bhli', q, rot)
    k = jnp.einsum('bhlj,lij->bhli', k, rot)
    scores = jnp.einsum('bhqd,bhkd->bhqk', q, k) * SCALE + mask
    p = jax.nn.softmax(scores.astype(jnp.float32), axis=-1)
    o = jnp.einsum('bhqk,bhkd->bhqd', p, v)
    o = o.transpose(0, 2, 1, 3).reshape(B, L, N_HEADS * HEAD_DIM) @ wo_t
    h = x + rms(o, w_postattn)
    hn = rms(h, w_preff)
    g = hn @ wg_t
    u = hn @ wu_t
    c = 0.7978845608028654
    gelu = 0.5 * g * (1.0 + jnp.tanh(c * (g + 0.044715 * g ** 3)))
    ff = (gelu * u) @ wd_t
    out = h + rms(ff, w_postff)
    return out, k, v


# ---------------------------------- main -------------------------------------
if __name__ == "__main__":
    key = jax.random.PRNGKey(0)
    ks = jax.random.split(key, 12)

    x = jax.random.normal(ks[0], (B, L, DIM), jnp.float32)

    # deterministic synthetic parameters (torch Linear weights are (out, in))
    w_in = 0.1 * jax.random.normal(ks[1], (1, DIM), jnp.float32)
    w_postattn = 0.1 * jax.random.normal(ks[2], (1, DIM), jnp.float32)
    w_preff = 0.1 * jax.random.normal(ks[3], (1, DIM), jnp.float32)
    w_postff = 0.1 * jax.random.normal(ks[4], (1, DIM), jnp.float32)
    s = 0.05
    wq = s * jax.random.normal(ks[5], (N_HEADS * HEAD_DIM, DIM), jnp.float32)
    wk = s * jax.random.normal(ks[6], (N_KV_HEADS * HEAD_DIM, DIM), jnp.float32)
    wv = s * jax.random.normal(ks[7], (N_KV_HEADS * HEAD_DIM, DIM), jnp.float32)
    wo = s * jax.random.normal(ks[8], (DIM, N_HEADS * HEAD_DIM), jnp.float32)
    wg = s * jax.random.normal(ks[9], (HIDDEN_DIM, DIM), jnp.float32)
    wu = s * jax.random.normal(ks[10], (HIDDEN_DIM, DIM), jnp.float32)
    wd = s * jax.random.normal(ks[11], (DIM, HIDDEN_DIM), jnp.float32)

    # pass transposed weights so the kernel computes y = x @ W^T directly
    params = (w_in, w_postattn, w_preff, w_postff,
              wq.T, wk.T, wv.T, wo.T, wg.T, wu.T, wd.T)

    mask = make_causal_mask(L)
    rot = make_rotation_matrix(L, HEAD_DIM, ROPE_THETA)   # reference only

    out, keys_o, vals_o = jax.block_until_ready(
        transformer_block(x, mask, params))

    ref_out, ref_k, ref_v = reference_block(x, rot, mask, params)

    # Kernel uses bf16 MXU operands (f32 accumulation) per the perf review, so
    # compare against the f32 reference with bf16-appropriate tolerances; real
    # structural bugs (mask/RoPE/norm) produce O(0.1 - 1) errors.
    assert jnp.allclose(out, ref_out, atol=5e-2, rtol=5e-2)
    assert float(jnp.mean(jnp.abs(out - ref_out))) < 1e-2
    assert jnp.allclose(keys_o, ref_k, atol=1e-2, rtol=1e-2)
    assert jnp.allclose(vals_o, ref_v, atol=1e-2, rtol=1e-2)

    print("KERNEL_OK")
</pallas_src>

<mosaic_0001>
module attributes {stable_mosaic.version = 11 : i64} {
  func.func @transformer_block_kernel(%arg0: memref<16x32xf32, #tpu.memory_space<vmem>>, %arg1: memref<16x32xf32, #tpu.memory_space<vmem>>, %arg2: memref<16x32xf32, #tpu.memory_space<vmem>>, %arg3: memref<32x32xbf16, #tpu.memory_space<vmem>>, %arg4: memref<16x16xf32, #tpu.memory_space<vmem>>, %arg5: memref<4x32xf32, #tpu.memory_space<vmem>>, %arg6: memref<32x64xbf16, #tpu.memory_space<vmem>>, %arg7: memref<32x32xbf16, #tpu.memory_space<vmem>>, %arg8: memref<32x128xbf16, #tpu.memory_space<vmem>>, %arg9: memref<64x32xbf16, #tpu.memory_space<vmem>>, %arg10: memref<16x32xf32, #tpu.memory_space<vmem>>, %arg11: memref<16x16xf32, #tpu.memory_space<vmem>>, %arg12: memref<16x16xf32, #tpu.memory_space<vmem>>) attributes {dimension_semantics = [], scalar_prefetch = 0 : i64, scratch_operands = 0 : i64, tpu.core_type = #tpu.core_type<tc>} {
    %c0 = arith.constant 0 : index
    %c0_0 = arith.constant 0 : index
    %0 = vector.load %arg0[%c0, %c0_0] : memref<16x32xf32, #tpu.memory_space<vmem>>, vector<16x32xf32>
    %c0_1 = arith.constant 0 : index
    %c0_2 = arith.constant 0 : index
    %1 = vector.load %arg5[%c0_1, %c0_2] : memref<4x32xf32, #tpu.memory_space<vmem>>, vector<4x32xf32>
    %2 = arith.mulf %0, %0 : vector<16x32xf32>
    %cst = arith.constant dense<0.000000e+00> : vector<16xf32>
    %3 = vector.multi_reduction <add>, %2, %cst [1] : vector<16x32xf32> to vector<16xf32>
    %4 = vector.shape_cast %3 : vector<16xf32> to vector<16x1xf32>
    %cst_3 = arith.constant 3.200000e+01 : f32
    %5 = vector.broadcast %cst_3 : f32 to vector<16x1xf32>
    %6 = arith.divf %4, %5 : vector<16x1xf32>
    %cst_4 = arith.constant 9.99999974E-6 : f32
    %7 = vector.broadcast %cst_4 : f32 to vector<16x1xf32>
    %8 = arith.addf %6, %7 : vector<16x1xf32>
    %9 = math.rsqrt %8 : vector<16x1xf32>
    %10 = vector.broadcast %9 : vector<16x1xf32> to vector<16x32xf32>
    %11 = arith.mulf %0, %10 : vector<16x32xf32>
    %12 = vector.extract_strided_slice %1 {offsets = [0, 0], sizes = [1, 32], strides = [1, 1]} : vector<4x32xf32> to vector<1x32xf32>
    %13 = vector.broadcast %12 : vector<1x32xf32> to vector<16x32xf32>
    %14 = arith.mulf %11, %13 : vector<16x32xf32>
    %15 = arith.truncf %14 : vector<16x32xf32> to vector<16x32xbf16>
    %c0_5 = arith.constant 0 : index
    %c0_6 = arith.constant 0 : index
    %16 = vector.load %arg6[%c0_5, %c0_6] : memref<32x64xbf16, #tpu.memory_space<vmem>>, vector<32x64xbf16>
    %cst_7 = arith.constant dense<0.000000e+00> : vector<16x64xf32>
    %17 = tpu.matmul %15, %16, %cst_7 {dimension_numbers = #tpu.dot_dimension_numbers<[1], [0], [0], [1], [0, 0, 1, 1], [], []>} : vector<16x32xbf16>, vector<32x64xbf16>, vector<16x64xf32> -> vector<16x64xf32>
    %18 = vector.extract_strided_slice %17 {offsets = [0, 0], sizes = [16, 32], strides = [1, 1]} : vector<16x64xf32> to vector<16x32xf32>
    %19 = vector.extract_strided_slice %17 {offsets = [0, 32], sizes = [16, 16], strides = [1, 1]} : vector<16x64xf32> to vector<16x16xf32>
    %20 = vector.extract_strided_slice %17 {offsets = [0, 48], sizes = [16, 16], strides = [1, 1]} : vector<16x64xf32> to vector<16x16xf32>
    %c0_8 = arith.constant 0 : index
    %c0_9 = arith.constant 0 : index
    %21 = vector.load %arg1[%c0_8, %c0_9] : memref<16x32xf32, #tpu.memory_space<vmem>>, vector<16x32xf32>
    %c0_10 = arith.constant 0 : index
    %c0_11 = arith.constant 0 : index
    %22 = vector.load %arg2[%c0_10, %c0_11] : memref<16x32xf32, #tpu.memory_space<vmem>>, vector<16x32xf32>
    %c0_12 = arith.constant 0 : index
    %c0_13 = arith.constant 0 : index
    %23 = vector.load %arg3[%c0_12, %c0_13] : memref<32x32xbf16, #tpu.memory_space<vmem>>, vector<32x32xbf16>
    %24 = arith.truncf %18 : vector<16x32xf32> to vector<16x32xbf16>
    %cst_14 = arith.constant dense<0.000000e+00> : vector<16x32xf32>
    %25 = tpu.matmul %24, %23, %cst_14 {dimension_numbers = #tpu.dot_dimension_numbers<[1], [0], [0], [1], [0, 0, 1, 1], [], []>} : vector<16x32xbf16>, vector<32x32xbf16>, vector<16x32xf32> -> vector<16x32xf32>
    %26 = arith.truncf %19 : vector<16x16xf32> to vector<16x16xbf16>
    %27 = vector.extract_strided_slice %23 {offsets = [0, 0], sizes = [16, 16], strides = [1, 1]} : vector<32x32xbf16> to vector<16x16xbf16>
    %cst_15 = arith.constant dense<0.000000e+00> : vector<16x16xf32>
    %28 = tpu.matmul %26, %27, %cst_15 {dimension_numbers = #tpu.dot_dimension_numbers<[1], [0], [0], [1], [0, 0, 1, 1], [], []>} : vector<16x16xbf16>, vector<16x16xbf16>, vector<16x16xf32> -> vector<16x16xf32>
    %29 = arith.mulf %18, %21 : vector<16x32xf32>
    %30 = arith.mulf %25, %22 : vector<16x32xf32>
    %31 = arith.addf %29, %30 : vector<16x32xf32>
    %32 = vector.extract_strided_slice %21 {offsets = [0, 0], sizes = [16, 16], strides = [1, 1]} : vector<16x32xf32> to vector<16x16xf32>
    %33 = arith.mulf %19, %32 : vector<16x16xf32>
    %34 = vector.extract_strided_slice %22 {offsets = [0, 0], sizes = [16, 16], strides = [1, 1]} : vector<16x32xf32> to vector<16x16xf32>
    %35 = arith.mulf %28, %34 : vector<16x16xf32>
    %36 = arith.addf %33, %35 : vector<16x16xf32>
    %c0_16 = arith.constant 0 : index
    %c0_17 = arith.constant 0 : index
    %37 = vector.load %arg11[%c0_16, %c0_17] : memref<16x16xf32, #tpu.memory_space<vmem>>, vector<16x16xf32>
    tpu.vector_store %arg11[%c0_16, %c0_17], %36 {strides = array<i32>} : memref<16x16xf32, #tpu.memory_space<vmem>>, vector<16x16xf32>,
    %c0_18 = arith.constant 0 : index
    %c0_19 = arith.constant 0 : index
    %38 = vector.load %arg12[%c0_18, %c0_19] : memref<16x16xf32, #tpu.memory_space<vmem>>, vector<16x16xf32>
    tpu.vector_store %arg12[%c0_18, %c0_19], %20 {strides = array<i32>} : memref<16x16xf32, #tpu.memory_space<vmem>>, vector<16x16xf32>,
    %c0_20 = arith.constant 0 : index
    %c0_21 = arith.constant 0 : index
    %39 = vector.load %arg4[%c0_20, %c0_21] : memref<16x16xf32, #tpu.memory_space<vmem>>, vector<16x16xf32>
    %40 = vector.extract_strided_slice %31 {offsets = [0, 0], sizes = [16, 8], strides = [1, 1]} : vector<16x32xf32> to vector<16x8xf32>
    %41 = arith.truncf %40 : vector<16x8xf32> to vector<16x8xbf16>
    %42 = vector.extract_strided_slice %36 {offsets = [0, 0], sizes = [16, 8], strides = [1, 1]} : vector<16x16xf32> to vector<16x8xf32>
    %43 = arith.truncf %42 : vector<16x8xf32> to vector<16x8xbf16>
    %44 = vector.extract_strided_slice %20 {offsets = [0, 0], sizes = [16, 8], strides = [1, 1]} : vector<16x16xf32> to vector<16x8xf32>
    %45 = arith.truncf %44 : vector<16x8xf32> to vector<16x8xbf16>
    %cst_22 = arith.constant dense<0.000000e+00> : vector<16x16xf32>
    %46 = tpu.matmul %41, %43, %cst_22 {dimension_numbers = #tpu.dot_dimension_numbers<[1], [1], [0], [0], [0, 0, 1, 0], [], []>} : vector<16x8xbf16>, vector<16x8xbf16>, vector<16x16xf32> -> vector<16x16xf32>
    %cst_23 = arith.constant 0.353553385 : f32
    %47 = vector.broadcast %cst_23 : f32 to vector<16x16xf32>
    %48 = arith.mulf %46, %47 : vector<16x16xf32>
    %49 = arith.addf %48, %39 : vector<16x16xf32>
    %cst_24 = arith.constant dense<0xFF800000> : vector<16xf32>
    %50 = vector.multi_reduction <maximumf>, %49, %cst_24 [1] : vector<16x16xf32> to vector<16xf32>
    %51 = vector.shape_cast %50 : vector<16xf32> to vector<16x1xf32>
    %52 = vector.broadcast %51 : vector<16x1xf32> to vector<16x16xf32>
    %53 = arith.subf %49, %52 : vector<16x16xf32>
    %54 = math.exp %53 : vector<16x16xf32>
    %cst_25 = arith.constant dense<0.000000e+00> : vector<16xf32>
    %55 = vector.multi_reduction <add>, %54, %cst_25 [1] : vector<16x16xf32> to vector<16xf32>
    %56 = vector.shape_cast %55 : vector<16xf32> to vector<16x1xf32>
    %57 = tpu.reciprocal %56 {approx = true} : vector<16x1xf32> -> vector<16x1xf32>
    %58 = vector.broadcast %57 : vector<16x1xf32> to vector<16x16xf32>
    %59 = arith.mulf %54, %58 : vector<16x16xf32>
    %60 = arith.truncf %59 : vector<16x16xf32> to vector<16x16xbf16>
    %cst_26 = arith.constant dense<0.000000e+00> : vector<16x8xf32>
    %61 = tpu.matmul %60, %45, %cst_26 {dimension_numbers = #tpu.dot_dimension_numbers<[1], [0], [0], [1], [0, 0, 1, 1], [], []>} : vector<16x16xbf16>, vector<16x8xbf16>, vector<16x8xf32> -> vector<16x8xf32>
    %62 = vector.extract_strided_slice %31 {offsets = [0, 8], sizes = [16, 8], strides = [1, 1]} : vector<16x32xf32> to vector<16x8xf32>
    %63 = arith.truncf %62 : vector<16x8xf32> to vector<16x8xbf16>
    %64 = vector.extract_strided_slice %36 {offsets = [0, 0], sizes = [16, 8], strides = [1, 1]} : vector<16x16xf32> to vector<16x8xf32>
    %65 = arith.truncf %64 : vector<16x8xf32> to vector<16x8xbf16>
    %66 = vector.extract_strided_slice %20 {offsets = [0, 0], sizes = [16, 8], strides = [1, 1]} : vector<16x16xf32> to vector<16x8xf32>
    %67 = arith.truncf %66 : vector<16x8xf32> to vector<16x8xbf16>
    %cst_27 = arith.constant dense<0.000000e+00> : vector<16x16xf32>
    %68 = tpu.matmul %63, %65, %cst_27 {dimension_numbers = #tpu.dot_dimension_numbers<[1], [1], [0], [0], [0, 0, 1, 0], [], []>} : vector<16x8xbf16>, vector<16x8xbf16>, vector<16x16xf32> -> vector<16x16xf32>
    %cst_28 = arith.constant 0.353553385 : f32
    %69 = vector.broadcast %cst_28 : f32 to vector<16x16xf32>
    %70 = arith.mulf %68, %69 : vector<16x16xf32>
    %71 = arith.addf %70, %39 : vector<16x16xf32>
    %cst_29 = arith.constant dense<0xFF800000> : vector<16xf32>
    %72 = vector.multi_reduction <maximumf>, %71, %cst_29 [1] : vector<16x16xf32> to vector<16xf32>
    %73 = vector.shape_cast %72 : vector<16xf32> to vector<16x1xf32>
    %74 = vector.broadcast %73 : vector<16x1xf32> to vector<16x16xf32>
    %75 = arith.subf %71, %74 : vector<16x16xf32>
    %76 = math.exp %75 : vector<16x16xf32>
    %cst_30 = arith.constant dense<0.000000e+00> : vector<16xf32>
    %77 = vector.multi_reduction <add>, %76, %cst_30 [1] : vector<16x16xf32> to vector<16xf32>
    %78 = vector.shape_cast %77 : vector<16xf32> to vector<16x1xf32>
    %79 = tpu.reciprocal %78 {approx = true} : vector<16x1xf32> -> vector<16x1xf32>
    %80 = vector.broadcast %79 : vector<16x1xf32> to vector<16x16xf32>
    %81 = arith.mulf %76, %80 : vector<16x16xf32>
    %82 = arith.truncf %81 : vector<16x16xf32> to vector<16x16xbf16>
    %cst_31 = arith.constant dense<0.000000e+00> : vector<16x8xf32>
    %83 = tpu.matmul %82, %67, %cst_31 {dimension_numbers = #tpu.dot_dimension_numbers<[1], [0], [0], [1], [0, 0, 1, 1], [], []>} : vector<16x16xbf16>, vector<16x8xbf16>, vector<16x8xf32> -> vector<16x8xf32>
    %84 = vector.extract_strided_slice %31 {offsets = [0, 16], sizes = [16, 8], strides = [1, 1]} : vector<16x32xf32> to vector<16x8xf32>
    %85 = arith.truncf %84 : vector<16x8xf32> to vector<16x8xbf16>
    %86 = vector.extract_strided_slice %36 {offsets = [0, 8], sizes = [16, 8], strides = [1, 1]} : vector<16x16xf32> to vector<16x8xf32>
    %87 = arith.truncf %86 : vector<16x8xf32> to vector<16x8xbf16>
    %88 = vector.extract_strided_slice %20 {offsets = [0, 8], sizes = [16, 8], strides = [1, 1]} : vector<16x16xf32> to vector<16x8xf32>
    %89 = arith.truncf %88 : vector<16x8xf32> to vector<16x8xbf16>
    %cst_32 = arith.constant dense<0.000000e+00> : vector<16x16xf32>
    %90 = tpu.matmul %85, %87, %cst_32 {dimension_numbers = #tpu.dot_dimension_numbers<[1], [1], [0], [0], [0, 0, 1, 0], [], []>} : vector<16x8xbf16>, vector<16x8xbf16>, vector<16x16xf32> -> vector<16x16xf32>
    %cst_33 = arith.constant 0.353553385 : f32
    %91 = vector.broadcast %cst_33 : f32 to vector<16x16xf32>
    %92 = arith.mulf %90, %91 : vector<16x16xf32>
    %93 = arith.addf %92, %39 : vector<16x16xf32>
    %cst_34 = arith.constant dense<0xFF800000> : vector<16xf32>
    %94 = vector.multi_reduction <maximumf>, %93, %cst_34 [1] : vector<16x16xf32> to vector<16xf32>
    %95 = vector.shape_cast %94 : vector<16xf32> to vector<16x1xf32>
    %96 = vector.broadcast %95 : vector<16x1xf32> to vector<16x16xf32>
    %97 = arith.subf %93, %96 : vector<16x16xf32>
    %98 = math.exp %97 : vector<16x16xf32>
    %cst_35 = arith.constant dense<0.000000e+00> : vector<16xf32>
    %99 = vector.multi_reduction <add>, %98, %cst_35 [1] : vector<16x16xf32> to vector<16xf32>
    %100 = vector.shape_cast %99 : vector<16xf32> to vector<16x1xf32>
    %101 = tpu.reciprocal %100 {approx = true} : vector<16x1xf32> -> vector<16x1xf32>
    %102 = vector.broadcast %101 : vector<16x1xf32> to vector<16x16xf32>
    %103 = arith.mulf %98, %102 : vector<16x16xf32>
    %104 = arith.truncf %103 : vector<16x16xf32> to vector<16x16xbf16>
    %cst_36 = arith.constant dense<0.000000e+00> : vector<16x8xf32>
    %105 = tpu.matmul %104, %89, %cst_36 {dimension_numbers = #tpu.dot_dimension_numbers<[1], [0], [0], [1], [0, 0, 1, 1], [], []>} : vector<16x16xbf16>, vector<16x8xbf16>, vector<16x8xf32> -> vector<16x8xf32>
    %106 = vector.extract_strided_slice %31 {offsets = [0, 24], sizes = [16, 8], strides = [1, 1]} : vector<16x32xf32> to vector<16x8xf32>
    %107 = arith.truncf %106 : vector<16x8xf32> to vector<16x8xbf16>
    %108 = vector.extract_strided_slice %36 {offsets = [0, 8], sizes = [16, 8], strides = [1, 1]} : vector<16x16xf32> to vector<16x8xf32>
    %109 = arith.truncf %108 : vector<16x8xf32> to vector<16x8xbf16>
    %110 = vector.extract_strided_slice %20 {offsets = [0, 8], sizes = [16, 8], strides = [1, 1]} : vector<16x16xf32> to vector<16x8xf32>
    %111 = arith.truncf %110 : vector<16x8xf32> to vector<16x8xbf16>
    %cst_37 = arith.constant dense<0.000000e+00> : vector<16x16xf32>
    %112 = tpu.matmul %107, %109, %cst_37 {dimension_numbers = #tpu.dot_dimension_numbers<[1], [1], [0], [0], [0, 0, 1, 0], [], []>} : vector<16x8xbf16>, vector<16x8xbf16>, vector<16x16xf32> -> vector<16x16xf32>
    %cst_38 = arith.constant 0.353553385 : f32
    %113 = vector.broadcast %cst_38 : f32 to vector<16x16xf32>
    %114 = arith.mulf %112, %113 : vector<16x16xf32>
    %115 = arith.addf %114, %39 : vector<16x16xf32>
    %cst_39 = arith.constant dense<0xFF800000> : vector<16xf32>
    %116 = vector.multi_reduction <maximumf>, %115, %cst_39 [1] : vector<16x16xf32> to vector<16xf32>
    %117 = vector.shape_cast %116 : vector<16xf32> to vector<16x1xf32>
    %118 = vector.broadcast %117 : vector<16x1xf32> to vector<16x16xf32>
    %119 = arith.subf %115, %118 : vector<16x16xf32>
    %120 = math.exp %119 : vector<16x16xf32>
    %cst_40 = arith.constant dense<0.000000e+00> : vector<16xf32>
    %121 = vector.multi_reduction <add>, %120, %cst_40 [1] : vector<16x16xf32> to vector<16xf32>
    %122 = vector.shape_cast %121 : vector<16xf32> to vector<16x1xf32>
    %123 = tpu.reciprocal %122 {approx = true} : vector<16x1xf32> -> vector<16x1xf32>
    %124 = vector.broadcast %123 : vector<16x1xf32> to vector<16x16xf32>
    %125 = arith.mulf %120, %124 : vector<16x16xf32>
    %126 = arith.truncf %125 : vector<16x16xf32> to vector<16x16xbf16>
    %cst_41 = arith.constant dense<0.000000e+00> : vector<16x8xf32>
    %127 = tpu.matmul %126, %111, %cst_41 {dimension_numbers = #tpu.dot_dimension_numbers<[1], [0], [0], [1], [0, 0, 1, 1], [], []>} : vector<16x16xbf16>, vector<16x8xbf16>, vector<16x8xf32> -> vector<16x8xf32>
    %128 = tpu.concatenate %61, %83, %105, %127 in 1 : vector<16x8xf32>, vector<16x8xf32>, vector<16x8xf32>, vector<16x8xf32> -> vector<16x32xf32>
    %129 = arith.truncf %128 : vector<16x32xf32> to vector<16x32xbf16>
    %c0_42 = arith.constant 0 : index
    %c0_43 = arith.constant 0 : index
    %130 = vector.load %arg7[%c0_42, %c0_43] : memref<32x32xbf16, #tpu.memory_space<vmem>>, vector<32x32xbf16>
    %cst_44 = arith.constant dense<0.000000e+00> : vector<16x32xf32>
    %131 = tpu.matmul %129, %130, %cst_44 {dimension_numbers = #tpu.dot_dimension_numbers<[1], [0], [0], [1], [0, 0, 1, 1], [], []>} : vector<16x32xbf16>, vector<32x32xbf16>, vector<16x32xf32> -> vector<16x32xf32>
    %132 = arith.mulf %131, %131 : vector<16x32xf32>
    %cst_45 = arith.constant dense<0.000000e+00> : vector<16xf32>
    %133 = vector.multi_reduction <add>, %132, %cst_45 [1] : vector<16x32xf32> to vector<16xf32>
    %134 = vector.shape_cast %133 : vector<16xf32> to vector<16x1xf32>
    %cst_46 = arith.constant 3.200000e+01 : f32
    %135 = vector.broadcast %cst_46 : f32 to vector<16x1xf32>
    %136 = arith.divf %134, %135 : vector<16x1xf32>
    %cst_47 = arith.constant 9.99999974E-6 : f32
    %137 = vector.broadcast %cst_47 : f32 to vector<16x1xf32>
    %138 = arith.addf %136, %137 : vector<16x1xf32>
    %139 = math.rsqrt %138 : vector<16x1xf32>
    %140 = vector.broadcast %139 : vector<16x1xf32> to vector<16x32xf32>
    %141 = arith.mulf %131, %140 : vector<16x32xf32>
    %142 = vector.extract_strided_slice %1 {offsets = [1, 0], sizes = [1, 32], strides = [1, 1]} : vector<4x32xf32> to vector<1x32xf32>
    %143 = vector.broadcast %142 : vector<1x32xf32> to vector<16x32xf32>
    %144 = arith.mulf %141, %143 : vector<16x32xf32>
    %145 = arith.addf %0, %144 : vector<16x32xf32>
    %146 = arith.mulf %145, %145 : vector<16x32xf32>
    %cst_48 = arith.constant dense<0.000000e+00> : vector<16xf32>
    %147 = vector.multi_reduction <add>, %146, %cst_48 [1] : vector<16x32xf32> to vector<16xf32>
    %148 = vector.shape_cast %147 : vector<16xf32> to vector<16x1xf32>
    %cst_49 = arith.constant 3.200000e+01 : f32
    %149 = vector.broadcast %cst_49 : f32 to vector<16x1xf32>
    %150 = arith.divf %148, %149 : vector<16x1xf32>
    %cst_50 = arith.constant 9.99999974E-6 : f32
    %151 = vector.broadcast %cst_50 : f32 to vector<16x1xf32>
    %152 = arith.addf %150, %151 : vector<16x1xf32>
    %153 = math.rsqrt %152 : vector<16x1xf32>
    %154 = vector.broadcast %153 : vector<16x1xf32> to vector<16x32xf32>
    %155 = arith.mulf %145, %154 : vector<16x32xf32>
    %156 = vector.extract_strided_slice %1 {offsets = [2, 0], sizes = [1, 32], strides = [1, 1]} : vector<4x32xf32> to vector<1x32xf32>
    %157 = vector.broadcast %156 : vector<1x32xf32> to vector<16x32xf32>
    %158 = arith.mulf %155, %157 : vector<16x32xf32>
    %159 = arith.truncf %158 : vector<16x32xf32> to vector<16x32xbf16>
    %c0_51 = arith.constant 0 : index
    %c0_52 = arith.constant 0 : index
    %160 = vector.load %arg8[%c0_51, %c0_52] : memref<32x128xbf16, #tpu.memory_space<vmem>>, vector<32x128xbf16>
    %cst_53 = arith.constant dense<0.000000e+00> : vector<16x128xf32>
    %161 = tpu.matmul %159, %160, %cst_53 {dimension_numbers = #tpu.dot_dimension_numbers<[1], [0], [0], [1], [0, 0, 1, 1], [], []>} : vector<16x32xbf16>, vector<32x128xbf16>, vector<16x128xf32> -> vector<16x128xf32>
    %162 = vector.extract_strided_slice %161 {offsets = [0, 0], sizes = [16, 64], strides = [1, 1]} : vector<16x128xf32> to vector<16x64xf32>
    %163 = vector.extract_strided_slice %161 {offsets = [0, 64], sizes = [16, 64], strides = [1, 1]} : vector<16x128xf32> to vector<16x64xf32>
    %cst_54 = arith.constant 5.000000e-01 : f32
    %164 = vector.broadcast %cst_54 : f32 to vector<16x64xf32>
    %165 = arith.mulf %164, %162 : vector<16x64xf32>
    %cst_55 = arith.constant 4.471500e-02 : f32
    %166 = vector.broadcast %cst_55 : f32 to vector<16x64xf32>
    %167 = arith.mulf %166, %162 : vector<16x64xf32>
    %168 = arith.mulf %167, %162 : vector<16x64xf32>
    %169 = arith.mulf %168, %162 : vector<16x64xf32>
    %170 = arith.addf %162, %169 : vector<16x64xf32>
    %cst_56 = arith.constant 0.797884583 : f32
    %171 = vector.broadcast %cst_56 : f32 to vector<16x64xf32>
    %172 = arith.mulf %171, %170 : vector<16x64xf32>
    %173 = math.tanh %172 : vector<16x64xf32>
    %cst_57 = arith.constant 1.000000e+00 : f32
    %174 = vector.broadcast %cst_57 : f32 to vector<16x64xf32>
    %175 = arith.addf %174, %173 : vector<16x64xf32>
    %176 = arith.mulf %165, %175 : vector<16x64xf32>
    %177 = arith.mulf %176, %163 : vector<16x64xf32>
    %178 = arith.truncf %177 : vector<16x64xf32> to vector<16x64xbf16>
    %c0_58 = arith.constant 0 : index
    %c0_59 = arith.constant 0 : index
    %179 = vector.load %arg9[%c0_58, %c0_59] : memref<64x32xbf16, #tpu.memory_space<vmem>>, vector<64x32xbf16>
    %cst_60 = arith.constant dense<0.000000e+00> : vector<16x32xf32>
    %180 = tpu.matmul %178, %179, %cst_60 {dimension_numbers = #tpu.dot_dimension_numbers<[1], [0], [0], [1], [0, 0, 1, 1], [], []>} : vector<16x64xbf16>, vector<64x32xbf16>, vector<16x32xf32> -> vector<16x32xf32>
    %181 = arith.mulf %180, %180 : vector<16x32xf32>
    %cst_61 = arith.constant dense<0.000000e+00> : vector<16xf32>
    %182 = vector.multi_reduction <add>, %181, %cst_61 [1] : vector<16x32xf32> to vector<16xf32>
    %183 = vector.shape_cast %182 : vector<16xf32> to vector<16x1xf32>
    %cst_62 = arith.constant 3.200000e+01 : f32
    %184 = vector.broadcast %cst_62 : f32 to vector<16x1xf32>
    %185 = arith.divf %183, %184 : vector<16x1xf32>
    %cst_63 = arith.constant 9.99999974E-6 : f32
    %186 = vector.broadcast %cst_63 : f32 to vector<16x1xf32>
    %187 = arith.addf %185, %186 : vector<16x1xf32>
    %188 = math.rsqrt %187 : vector<16x1xf32>
    %189 = vector.broadcast %188 : vector<16x1xf32> to vector<16x32xf32>
    %190 = arith.mulf %180, %189 : vector<16x32xf32>
    %191 = vector.extract_strided_slice %1 {offsets = [3, 0], sizes = [1, 32], strides = [1, 1]} : vector<4x32xf32> to vector<1x32xf32>
    %192 = vector.broadcast %191 : vector<1x32xf32> to vector<16x32xf32>
    %193 = arith.mulf %190, %192 : vector<16x32xf32>
    %194 = arith.addf %145, %193 : vector<16x32xf32>
    %c0_64 = arith.constant 0 : index
    %c0_65 = arith.constant 0 : index
    %195 = vector.load %arg10[%c0_64, %c0_65] : memref<16x32xf32, #tpu.memory_space<vmem>>, vector<16x32xf32>
    tpu.vector_store %arg10[%c0_64, %c0_65], %194 {strides = array<i32>} : memref<16x32xf32, #tpu.memory_space<vmem>>, vector<16x32xf32>,
    return
  }
}

</mosaic_0001>

<llo_original>
// kernel: tpu_custom_call.1
$region0: #{tpu_custom_call.1}
  #allocation0 [shape = 'u32[]', space=smem, size = 0x4, offset = 0x4, fixed_abs, tag = 'smem constant byte address 0x4 - core index']
  #allocation1 [shape = 'u32[72,128]{1,0:T(1,128)}', space=vmem, size = 0x9000, scoped, tag = 'internal scratch']
  %s0 = inlined_call_operand.vmem [shape: f32[16,32], index: 0, kind: input, shape index: {}]
  %s1 = inlined_call_operand.vmem [shape: f32[16,32], index: 1, kind: input, shape index: {}]
  %s2 = inlined_call_operand.vmem [shape: f32[16,32], index: 2, kind: input, shape index: {}]
  %s3 = inlined_call_operand.hbm [shape: bf16[32,32], index: 3, kind: input, shape index: {}]
  %s4 = inlined_call_operand.hbm [shape: f32[16,16], index: 4, kind: input, shape index: {}]
  %s5 = inlined_call_operand.vmem [shape: f32[4,32], index: 5, kind: input, shape index: {}]
  %s6 = inlined_call_operand.hbm [shape: bf16[32,64], index: 6, kind: input, shape index: {}]
  %s7 = inlined_call_operand.hbm [shape: bf16[32,32], index: 7, kind: input, shape index: {}]
  %s8 = inlined_call_operand.hbm [shape: bf16[32,128], index: 8, kind: input, shape index: {}]
  %s9 = inlined_call_operand.vmem [shape: bf16[64,32], index: 9, kind: input, shape index: {}]
  %s10 = inlined_call_operand.hbm [shape: f32[16,32], index: 10, kind: output, shape index: {0}]
  %s11 = inlined_call_operand.hbm [shape: f32[16,16], index: 11, kind: output, shape index: {1}]
  %s12 = inlined_call_operand.hbm [shape: f32[16,16], index: 12, kind: output, shape index: {2}]
  %13 = xla_tuple %s10, %s11, %s12
  %s14 = sld [smem:[#allocation0]]
  $region86: #{tpu_custom_call.1} parent=0
    _
  %s16 = ssub.s32 1, %s14
  %s17 = scalar_select 0, %s16, %s14
  $region1: #{tpu_custom_call.1} parent=0
    #allocation2 [shape = 'u8[8192]{0}', space=vmem, size = 0x2000, scoped, tag = 'input window, operand 3, single buffered']
    #allocation3 [shape = 's32[1]{0}', space=sflag, size = 0x4, scoped, tag = 'scoped memory for tpu_custom_call.1']
    #allocation4 [shape = 's32[1]{0}', space=sflag, size = 0x4, scoped, tag = 'scoped memory for tpu_custom_call.1']
    #allocation5 [shape = 'u8[8192]{0}', space=vmem, size = 0x2000, scoped, tag = 'input window, operand 4, single buffered']
    #allocation6 [shape = 's32[1]{0}', space=sflag, size = 0x4, scoped, tag = 'scoped memory for tpu_custom_call.1']
    #allocation7 [shape = 'u8[8192]{0}', space=vmem, size = 0x2000, scoped, tag = 'input window, operand 6, single buffered']
    #allocation8 [shape = 'u8[8192]{0}', space=vmem, size = 0x2000, scoped, tag = 'input window, operand 7, single buffered']
    #allocation9 [shape = 's32[1]{0}', space=sflag, size = 0x4, scoped, tag = 'scoped memory for tpu_custom_call.1']
    #allocation10 [shape = 'u8[8192]{0}', space=vmem, size = 0x2000, scoped, tag = 'input window, operand 8, single buffered']
    #allocation11 [shape = 'u8[8192]{0}', space=vmem, size = 0x2000, scoped, tag = 'output window, operand 0, single buffered']
    #allocation12 [shape = 'u8[8192]{0}', space=vmem, size = 0x2000, scoped, tag = 'output window, operand 1, single buffered']
    #allocation13 [shape = 's32[1]{0}', space=sflag, size = 0x4, scoped, tag = 'scoped memory for tpu_custom_call.1']
    #allocation14 [shape = 'u8[8192]{0}', space=vmem, size = 0x2000, scoped, tag = 'output window, operand 2, single buffered']
    %18 = vsyncpa [#allocation3], 0
    %19 = vsyncpa [#allocation6], 0
    %20 = vsyncpa [#allocation9], 0
    %21 = vsyncpa [#allocation4], 0
    %22 = vsyncpa [#allocation13], 0
    // Predicated region
    $region2: #{tpu_custom_call.1} parent=1 // pred_check
      _
    $region3: #{tpu_custom_call.1} parent=1 // pred_check_branch
      %24 = sbr.rel (0) target = $region5
    $region4: #{tpu_custom_call.1} parent=1 // pred_region
      _
    $region5: #{tpu_custom_call.1} parent=1 // pred_fallthru
      _
    // Predicated region
    $region6: #{tpu_custom_call.1} parent=1 // pred_check
      _
    $region7: #{tpu_custom_call.1} parent=1 // pred_check_branch
      %26 = sbr.rel (0) target = $region9
    $region8: #{tpu_custom_call.1} parent=1 // pred_region
      _
    $region9: #{tpu_custom_call.1} parent=1 // pred_fallthru
      _
    // Predicated region
    $region10: #{tpu_custom_call.1} parent=1 // pred_check
      _
    $region11: #{tpu_custom_call.1} parent=1 // pred_check_branch
      %28 = sbr.rel (0) target = $region13
    $region12: #{tpu_custom_call.1} parent=1 // pred_region
      _
    $region13: #{tpu_custom_call.1} parent=1 // pred_fallthru
      _
    // Predicated region
    $region14: #{tpu_custom_call.1} parent=1 // pred_check
      _
    $region15: #{tpu_custom_call.1} parent=1 // pred_check_branch
      %30 = sbr.rel (0) target = $region17
    $region16: #{tpu_custom_call.1} parent=1 // pred_region
      %32 = vsyncadd [#allocation3], 0
      %s33 = sshll.u32 %s3, 4
      %s34 = int_to_ptr.hbm [resolvable:$true] %s33
      %s35 = sshll.u32 [#allocation2], 4
      %s36 = int_to_ptr.vmem [resolvable:$true] %s35
      %41 = dma.hbm_to_vmem [thread:$0]  %s34, 256, %s36, [#allocation3], 64, 64, 4
    $region17: #{tpu_custom_call.1} parent=1 // pred_fallthru
      _
    // Predicated region
    $region18: #{tpu_custom_call.1} parent=1 // pred_check
      _
    $region19: #{tpu_custom_call.1} parent=1 // pred_check_branch
      %43 = sbr.rel (0) target = $region21
    $region20: #{tpu_custom_call.1} parent=1 // pred_region
      %45 = vsyncadd [#allocation6], 0
      %s46 = sshll.u32 %s4, 4
      %s47 = int_to_ptr.hbm [resolvable:$true] %s46
      %s48 = sshll.u32 [#allocation5], 4
      %s49 = int_to_ptr.vmem [resolvable:$true] %s48
      %54 = dma.hbm_to_vmem [thread:$0]  %s47, 256, %s49, [#allocation6], 128, 128, 8
    $region21: #{tpu_custom_call.1} parent=1 // pred_fallthru
      _
    // Predicated region
    $region22: #{tpu_custom_call.1} parent=1 // pred_check
      _
    $region23: #{tpu_custom_call.1} parent=1 // pred_check_branch
      %56 = sbr.rel (0) target = $region25
    $region24: #{tpu_custom_call.1} parent=1 // pred_region
      _
    $region25: #{tpu_custom_call.1} parent=1 // pred_fallthru
      _
    // Predicated region
    $region26: #{tpu_custom_call.1} parent=1 // pred_check
      _
    $region27: #{tpu_custom_call.1} parent=1 // pred_check_branch
      %58 = sbr.rel (0) target = $region29
    $region28: #{tpu_custom_call.1} parent=1 // pred_region
      %60 = vsyncadd [#allocation6], 0
      %s61 = sshll.u32 %s6, 4
      %s62 = int_to_ptr.hbm [resolvable:$true] %s61
      %s63 = sshll.u32 [#allocation7], 4
      %s64 = int_to_ptr.vmem [resolvable:$true] %s63
      %69 = dma.hbm_to_vmem [thread:$0]  %s62, 256, %s64, [#allocation6], 64, 64, 4
    $region29: #{tpu_custom_call.1} parent=1 // pred_fallthru
      _
    // Predicated region
    $region30: #{tpu_custom_call.1} parent=1 // pred_check
      _
    $region31: #{tpu_custom_call.1} parent=1 // pred_check_branch
      %71 = sbr.rel (0) target = $region33
    $region32: #{tpu_custom_call.1} parent=1 // pred_region
      %73 = vsyncadd [#allocation9], 0
      %s74 = sshll.u32 %s7, 4
      %s75 = int_to_ptr.hbm [resolvable:$true] %s74
      %s76 = sshll.u32 [#allocation8], 4
      %s77 = int_to_ptr.vmem [resolvable:$true] %s76
      %82 = dma.hbm_to_vmem [thread:$0]  %s75, 256, %s77, [#allocation9], 64, 64, 4
    $region33: #{tpu_custom_call.1} parent=1 // pred_fallthru
      _
    // Predicated region
    $region34: #{tpu_custom_call.1} parent=1 // pred_check
      _
    $region35: #{tpu_custom_call.1} parent=1 // pred_check_branch
      %84 = sbr.rel (0) target = $region37
    $region36: #{tpu_custom_call.1} parent=1 // pred_region
      %86 = vsyncadd [#allocation9], 0
      %s87 = sshll.u32 %s8, 4
      %s88 = int_to_ptr.hbm [resolvable:$true] %s87
      %s89 = sshll.u32 [#allocation10], 4
      %s90 = int_to_ptr.vmem [resolvable:$true] %s89
      %95 = dma.hbm_to_vmem [thread:$0]  %s88, 256, %s90, [#allocation9], 64, 64, 4
    $region37: #{tpu_custom_call.1} parent=1 // pred_fallthru
      _
    // Predicated region
    $region38: #{tpu_custom_call.1} parent=1 // pred_check
      _
    $region39: #{tpu_custom_call.1} parent=1 // pred_check_branch
      %97 = sbr.rel (0) target = $region41
    $region40: #{tpu_custom_call.1} parent=1 // pred_region
      _
    $region41: #{tpu_custom_call.1} parent=1 // pred_fallthru
      _
    // Predicated region
    $region42: #{tpu_custom_call.1} parent=1 // pred_check
      _
    $region43: #{tpu_custom_call.1} parent=1 // pred_check_branch
      %99 = sbr.rel (0) target = $region45
    $region44: #{tpu_custom_call.1} parent=1 // pred_region
      %101 = dma.done [#allocation3], 256
    $region45: #{tpu_custom_call.1} parent=1 // pred_fallthru
      _
    // Predicated region
    $region46: #{tpu_custom_call.1} parent=1 // pred_check
      _
    $region47: #{tpu_custom_call.1} parent=1 // pred_check_branch
      %103 = sbr.rel (0) target = $region49
    $region48: #{tpu_custom_call.1} parent=1 // pred_region
      %105 = dma.done [#allocation6], 256
    $region49: #{tpu_custom_call.1} parent=1 // pred_fallthru
      _
    // Predicated region
    $region50: #{tpu_custom_call.1} parent=1 // pred_check
      _
    $region51: #{tpu_custom_call.1} parent=1 // pred_check_branch
      %107 = sbr.rel (0) target = $region53
    $region52: #{tpu_custom_call.1} parent=1 // pred_region
      %109 = dma.done [#allocation6], 256
    $region53: #{tpu_custom_call.1} parent=1 // pred_fallthru
      _
    // Predicated region
    $region54: #{tpu_custom_call.1} parent=1 // pred_check
      _
    $region55: #{tpu_custom_call.1} parent=1 // pred_check_branch
      %111 = sbr.rel (0) target = $region57
    $region56: #{tpu_custom_call.1} parent=1 // pred_region
      %113 = dma.done [#allocation9], 256
    $region57: #{tpu_custom_call.1} parent=1 // pred_fallthru
      _
    // Predicated region
    $region58: #{tpu_custom_call.1} parent=1 // pred_check
      _
    $region59: #{tpu_custom_call.1} parent=1 // pred_check_branch
      %115 = sbr.rel (0) target = $region61
    $region60: #{tpu_custom_call.1} parent=1 // pred_region
      %117 = dma.done [#allocation9], 256
    $region61: #{tpu_custom_call.1} parent=1 // pred_fallthru
      _
    %v119 = vld [vmem:[%s0] sm:$0xff]
    %v120 = vld [vmem:[%s0 + $0x8] sm:$0xff]
    %v121 = vld [vmem:[%s5] sm:$0xf]
    %v122 = vmul.f32 %v119, %v119
    %v123 = vmul.f32 %v120, %v120
    %vm124 = vcmask 261120
    %v125 = vsel %vm124, %v122, 0.0
    %126 = vadd.xlane.f32.xlu0 %v125
    %v127 = vpop.xlane.xlu0 %126
    %v128 = vsel %vm124, %v123, 0.0
    %129 = vadd.xlane.f32.xlu0 %v128
    %v130 = vpop.xlane.xlu0 %129
    %v131 = vrcp.pop 32.0
    %v132 = vmul.f32 32.0, %v131
    %v133 = vsub.f32 1.0, %v132
    %v134 = vmul.f32 %v131, %v133
    %v135 = vadd.f32 %v131, %v134
    %vm136 = vweird.f32 %v131
    %v137 = vsel %vm136, %v131, %v135
    %v138 = vmul.f32 %v127, %v137
    %v139 = vmul.f32 %v130, %v137
    %v140 = vadd.f32 %v138, 1e-05
    %v141 = vadd.f32 %v139, 1e-05
    %v142 = vrsqrt.pop %v140
    %v143 = vmul.f32 %v142, %v140
    %v144 = vmul.f32 %v143, %v142
    %v145 = vmul.f32 0.5, %v144
    %v146 = vsub.f32 1.5, %v145
    %v147 = vmul.f32 %v142, %v146
    %vm148 = vweird.f32 %v140
    %vm149 = vweird.f32 %v142
    %vm150 = vmor %vm148, %vm149
    %v151 = vsel %vm150, %v142, %v147
    %v152 = vrsqrt.pop %v141
    %v153 = vmul.f32 %v152, %v141
    %v154 = vmul.f32 %v153, %v152
    %v155 = vmul.f32 0.5, %v154
    %v156 = vsub.f32 1.5, %v155
    %v157 = vmul.f32 %v152, %v156
    %vm158 = vweird.f32 %v141
    %vm159 = vweird.f32 %v152
    %vm160 = vmor %vm158, %vm159
    %v161 = vsel %vm160, %v152, %v157
    %v162 = vmul.f32 %v119, %v151
    %v163 = vmul.f32 %v120, %v161
    %v164 = vperm.slane %v121, 0
    %v165 = vmul.f32 %v162, %v164
    %v166 = vmul.f32 %v163, %v164
    %v167 = vpack.c.bf16 %v166, %v165
    %v168 = vld [vmem:[#allocation7] sm:$0xf]
    %v169 = vld [vmem:[#allocation7 + $0x4] sm:$0xf]
    %v170 = vld [vmem:[#allocation7 + $0x8] sm:$0xf]
    %v171 = vld [vmem:[#allocation7 + $0xc] sm:$0xf]
    %v176 = vunpack.c.l.b16 %v168
    %v177 = vunpack.c.l.b16 %v169
    %v178 = vunpack.c.l.b16 %v170
    %v179 = vunpack.c.l.b16 %v171
    %v180 = vpack.c.b16 %v177, %v176
    %v181 = vpack.c.b16 %v179, %v178
    %v185 = vsel %vm124, %v167, 0
    %187 = vmatpush.bf16.msra.mxu0 0
    %188 = vmatpush.bf16.msra.mxu0 0
    %189 = vmatpush.bf16.msra.mxu0 0
    %190 = vmatpush.bf16.msra.mxu0 0
    %191 = vmatpush.bf16.msra.mxu0 0
    %192 = vmatpush.bf16.msra.mxu0 0
    %193 = vmatpush.bf16.msra.mxu0 %v181
    %194 = vmatpush.bf16.msra.mxu0 %v180
    %195 = vmatmul.bf16.gmra.mxu0 %v185
    %v196 = vpop.f32.mrf.mxu0
    %v197 = vadd.f32 0.0, %v196
    %v198 = vpop.f32.mrf.mxu0
    %v199 = vadd.f32 0.0, %v198
    %200 = vdwg.mxu0
    %v201 = vld [vmem:[%s1] sm:$0xff]
    %v202 = vld [vmem:[%s1 + $0x8] sm:$0xff]
    %v203 = vld [vmem:[%s2] sm:$0xff]
    %v204 = vld [vmem:[%s2 + $0x8] sm:$0xff]
    %v205 = vld [vmem:[#allocation2] sm:$0xf]
    %v206 = vld [vmem:[#allocation2 + $0x4] sm:$0xf]
    %v207 = vld [vmem:[#allocation2 + $0x8] sm:$0xf]
    %v208 = vld [vmem:[#allocation2 + $0xc] sm:$0xf]
    %v209 = vpack.c.bf16 %v199, %v197
    %v214 = vunpack.c.l.b16 %v205
    %v215 = vunpack.c.l.b16 %v206
    %v216 = vunpack.c.l.b16 %v207
    %v217 = vunpack.c.l.b16 %v208
    %v218 = vpack.c.b16 %v215, %v214
    %v219 = vpack.c.b16 %v217, %v216
    %v223 = vsel %vm124, %v209, 0
    %225 = vmatpush.bf16.msra.mxu0 0
    %226 = vmatpush.bf16.msra.mxu0 0
    %227 = vmatpush.bf16.msra.mxu0 0
    %228 = vmatpush.bf16.msra.mxu0 0
    %229 = vmatpush.bf16.msra.mxu0 0
    %230 = vmatpush.bf16.msra.mxu0 0
    %231 = vmatpush.bf16.msra.mxu0 %v219
    %232 = vmatpush.bf16.msra.mxu0 %v218
    %233 = vmatmul.bf16.gmra.mxu0 %v223
    %v234 = vpop.f32.mrf.mxu0
    %v235 = vadd.f32 0.0, %v234
    %v236 = vpop.f32.mrf.mxu0
    %v237 = vadd.f32 0.0, %v236
    %238 = vdwg.mxu0
    %240 = vrot.lane.b32.xlu0 %v209, 96
    %v241 = vpop.permute.xlu0 %240
    %vm242 = vcmask 130048
    %v244 = vsel %vm242, %v241, 0
    %246 = vmatpush.bf16.msra.mxu0 0
    %247 = vmatpush.bf16.msra.mxu0 0
    %248 = vmatpush.bf16.msra.mxu0 0
    %249 = vmatpush.bf16.msra.mxu0 0
    %250 = vmatpush.bf16.msra.mxu0 0
    %251 = vmatpush.bf16.msra.mxu0 0
    %252 = vmatpush.bf16.msra.mxu0 0
    %253 = vmatpush.bf16.msra.mxu0 %v218
    %254 = vmatmul.bf16.gmra.mxu0 %v244
    %v255 = vpop.f32.mrf.mxu0
    %v256 = vadd.f32 0.0, %v255
    %v257 = vpop.f32.mrf.mxu0
    %v258 = vadd.f32 0.0, %v257
    %259 = vdwg.mxu0
    %v260 = vmul.f32 %v197, %v201
    %v261 = vmul.f32 %v199, %v202
    %v262 = vmul.f32 %v235, %v203
    %v263 = vmul.f32 %v237, %v204
    %v264 = vadd.f32 %v260, %v262
    %v265 = vadd.f32 %v261, %v263
    %268 = vrot.lane.b32.xlu0 %v201, 32
    %v269 = vpop.permute.xlu0 %268
    %270 = vrot.lane.b32.xlu0 %v202, 32
    %v271 = vpop.permute.xlu0 %270
    %v274 = vmul.f32 %v197, %v269
    %v275 = vmul.f32 %v199, %v271
    %v276 = vmul.f32 %v256, %v203
    %v277 = vmul.f32 %v258, %v204
    %280 = vrot.lane.b32.xlu0 %v276, 32
    %v281 = vpop.permute.xlu0 %280
    %282 = vrot.lane.b32.xlu0 %v277, 32
    %v283 = vpop.permute.xlu0 %282
    %v286 = vadd.f32 %v274, %v281
    %v287 = vadd.f32 %v275, %v283
    %290 = vrot.lane.b32.xlu0 %v286, 96
    %v291 = vpop.permute.xlu0 %290
    %292 = vrot.lane.b32.xlu0 %v287, 96
    %v293 = vpop.permute.xlu0 %292
    %296 = vst.msk [vmem:[#allocation12] sm:$0xff] %vm242, %v291
    %297 = vst.msk [vmem:[#allocation12 + $0x8] sm:$0xff] %vm242, %v293
    %300 = vrot.lane.b32.xlu0 %v197, 80
    %v301 = vpop.permute.xlu0 %300
    %302 = vrot.lane.b32.xlu0 %v199, 80
    %v303 = vpop.permute.xlu0 %302
    %306 = vst.msk [vmem:[#allocation14] sm:$0xff] %vm242, %v301
    %307 = vst.msk [vmem:[#allocation14 + $0x8] sm:$0xff] %vm242, %v303
    %v308 = vld [vmem:[#allocation5] sm:$0xff]
    %v309 = vld [vmem:[#allocation5 + $0x8] sm:$0xff]
    %v310 = vpack.c.bf16 %v265, %v264
    %v311 = vpack.c.bf16 %v287, %v286
    %313 = vrot.lane.b32.xlu0 %v311, 96
    %v314 = vpop.permute.xlu0 %313
    %vm315 = vcmask 64512
    %v317 = vsel %vm315, %v310, 0
    %v320 = vsel %vm315, %v314, 0
    %322 = vmatpush.bf16.xpose.msra.mxu0 0
    %323 = vmatpush.bf16.xpose.msra.mxu0 0
    %324 = vmatpush.bf16.xpose.msra.mxu0 0
    %325 = vmatpush.bf16.xpose.msra.mxu0 0
    %326 = vmatpush.bf16.xpose.msra.mxu0 0
    %327 = vmatpush.bf16.xpose.msra.mxu0 0
    %328 = vmatpush.bf16.xpose.msra.mxu0 0
    %329 = vmatpush.bf16.xpose.msra.mxu0 %v320
    %330 = vmatmul.bf16.gmra.mxu0 %v317
    %v331 = vpop.f32.mrf.mxu0
    %v332 = vadd.f32 0.0, %v331
    %v333 = vpop.f32.mrf.mxu0
    %v334 = vadd.f32 0.0, %v333
    %335 = vdwg.mxu0
    %v336 = vmul.f32 %v332, 0.35355338
    %v337 = vmul.f32 %v334, 0.35355338
    %v338 = vadd.f32 %v336, %v308
    %v339 = vadd.f32 %v337, %v309
    %v340 = vsel %vm242, %v338, -inf
    %341 = vmax.xlane.f32.xlu0 %v340
    %v342 = vpop.xlane.xlu0 %341
    %v343 = vsel %vm242, %v339, -inf
    %344 = vmax.xlane.f32.xlu0 %v343
    %v345 = vpop.xlane.xlu0 %344
    %v346 = vsub.f32 %v338, %v342
    %v347 = vsub.f32 %v339, %v345
    %v348 = vmul.f32 %v346, 1.442695
    %v349 = vpow.pop %v348
    %v350 = vmul.f32 %v347, 1.442695
    %v351 = vpow.pop %v350
    %v352 = vsel %vm242, %v349, 0.0
    %353 = vadd.xlane.f32.xlu0 %v352
    %v354 = vpop.xlane.xlu0 %353
    %v355 = vsel %vm242, %v351, 0.0
    %356 = vadd.xlane.f32.xlu0 %v355
    %v357 = vpop.xlane.xlu0 %356
    %v358 = vrcp.pop %v354
    %v359 = vrcp.pop %v357
    %v360 = vmul.f32 %v349, %v358
    %v361 = vmul.f32 %v351, %v359
    %v362 = vpack.c.bf16 %v361, %v360
    %363 = vrot.lane.b32.xlu0 %v209, 80
    %v364 = vpop.permute.xlu0 %363
    %v367 = vsel %vm242, %v362, 0
    %369 = vmatpush.bf16.msra.mxu0 0
    %370 = vmatpush.bf16.msra.mxu0 0
    %371 = vmatpush.bf16.msra.mxu0 0
    %372 = vmatpush.bf16.msra.mxu0 0
    %373 = vmatpush.bf16.msra.mxu0 0
    %374 = vmatpush.bf16.msra.mxu0 0
    %375 = vmatpush.bf16.msra.mxu0 0
    %376 = vmatpush.bf16.msra.mxu0 %v364
    %377 = vmatmul.bf16.gmra.mxu0 %v367
    %v378 = vpop.f32.mrf.mxu0
    %v379 = vadd.f32 0.0, %v378
    %v380 = vpop.f32.mrf.mxu0
    %v381 = vadd.f32 0.0, %v380
    %382 = vdwg.mxu0
    %384 = vrot.lane.b32.xlu0 %v310, 120
    %v385 = vpop.permute.xlu0 %384
    %v387 = vsel %vm315, %v385, 0
    %389 = vmatpush.bf16.xpose.msra.mxu0 0
    %390 = vmatpush.bf16.xpose.msra.mxu0 0
    %391 = vmatpush.bf16.xpose.msra.mxu0 0
    %392 = vmatpush.bf16.xpose.msra.mxu0 0
    %393 = vmatpush.bf16.xpose.msra.mxu0 0
    %394 = vmatpush.bf16.xpose.msra.mxu0 0
    %395 = vmatpush.bf16.xpose.msra.mxu0 0
    %396 = vmatpush.bf16.xpose.msra.mxu0 %v320
    %397 = vmatmul.bf16.gmra.mxu0 %v387
    %v398 = vpop.f32.mrf.mxu0
    %v399 = vadd.f32 0.0, %v398
    %v400 = vpop.f32.mrf.mxu0
    %v401 = vadd.f32 0.0, %v400
    %402 = vdwg.mxu0
    %v403 = vmul.f32 %v399, 0.35355338
    %v404 = vmul.f32 %v401, 0.35355338
    %v405 = vadd.f32 %v403, %v308
    %v406 = vadd.f32 %v404, %v309
    %v407 = vsel %vm242, %v405, -inf
    %408 = vmax.xlane.f32.xlu0 %v407
    %v409 = vpop.xlane.xlu0 %408
    %v410 = vsel %vm242, %v406, -inf
    %411 = vmax.xlane.f32.xlu0 %v410
    %v412 = vpop.xlane.xlu0 %411
    %v413 = vsub.f32 %v405, %v409
    %v414 = vsub.f32 %v406, %v412
    %v415 = vmul.f32 %v413, 1.442695
    %v416 = vpow.pop %v415
    %v417 = vmul.f32 %v414, 1.442695
    %v418 = vpow.pop %v417
    %v419 = vsel %vm242, %v416, 0.0
    %420 = vadd.xlane.f32.xlu0 %v419
    %v421 = vpop.xlane.xlu0 %420
    %v422 = vsel %vm242, %v418, 0.0
    %423 = vadd.xlane.f32.xlu0 %v422
    %v424 = vpop.xlane.xlu0 %423
    %v425 = vrcp.pop %v421
    %v426 = vrcp.pop %v424
    %v427 = vmul.f32 %v416, %v425
    %v428 = vmul.f32 %v418, %v426
    %v429 = vpack.c.bf16 %v428, %v427
    %v431 = vsel %vm242, %v429, 0
    %433 = vmatpush.bf16.msra.mxu0 0
    %434 = vmatpush.bf16.msra.mxu0 0
    %435 = vmatpush.bf16.msra.mxu0 0
    %436 = vmatpush.bf16.msra.mxu0 0
    %437 = vmatpush.bf16.msra.mxu0 0
    %438 = vmatpush.bf16.msra.mxu0 0
    %439 = vmatpush.bf16.msra.mxu0 0
    %440 = vmatpush.bf16.msra.mxu0 %v364
    %441 = vmatmul.bf16.gmra.mxu0 %v431
    %v442 = vpop.f32.mrf.mxu0
    %v443 = vadd.f32 0.0, %v442
    %v444 = vpop.f32.mrf.mxu0
    %v445 = vadd.f32 0.0, %v444
    %446 = vdwg.mxu0
    %447 = vrot.lane.b32.xlu0 %v310, 112
    %v448 = vpop.permute.xlu0 %447
    %449 = vrot.lane.b32.xlu0 %v311, 88
    %v450 = vpop.permute.xlu0 %449
    %v452 = vsel %vm315, %v448, 0
    %v455 = vsel %vm315, %v450, 0
    %457 = vmatpush.bf16.xpose.msra.mxu0 0
    %458 = vmatpush.bf16.xpose.msra.mxu0 0
    %459 = vmatpush.bf16.xpose.msra.mxu0 0
    %460 = vmatpush.bf16.xpose.msra.mxu0 0
    %461 = vmatpush.bf16.xpose.msra.mxu0 0
    %462 = vmatpush.bf16.xpose.msra.mxu0 0
    %463 = vmatpush.bf16.xpose.msra.mxu0 0
    %464 = vmatpush.bf16.xpose.msra.mxu0 %v455
    %465 = vmatmul.bf16.gmra.mxu0 %v452
    %v466 = vpop.f32.mrf.mxu0
    %v467 = vadd.f32 0.0, %v466
    %v468 = vpop.f32.mrf.mxu0
    %v469 = vadd.f32 0.0, %v468
    %470 = vdwg.mxu0
    %v471 = vmul.f32 %v467, 0.35355338
    %v472 = vmul.f32 %v469, 0.35355338
    %v473 = vadd.f32 %v471, %v308
    %v474 = vadd.f32 %v472, %v309
    %v475 = vsel %vm242, %v473, -inf
    %476 = vmax.xlane.f32.xlu0 %v475
    %v477 = vpop.xlane.xlu0 %476
    %v478 = vsel %vm242, %v474, -inf
    %479 = vmax.xlane.f32.xlu0 %v478
    %v480 = vpop.xlane.xlu0 %479
    %v481 = vsub.f32 %v473, %v477
    %v482 = vsub.f32 %v474, %v480
    %v483 = vmul.f32 %v481, 1.442695
    %v484 = vpow.pop %v483
    %v485 = vmul.f32 %v482, 1.442695
    %v486 = vpow.pop %v485
    %v487 = vsel %vm242, %v484, 0.0
    %488 = vadd.xlane.f32.xlu0 %v487
    %v489 = vpop.xlane.xlu0 %488
    %v490 = vsel %vm242, %v486, 0.0
    %491 = vadd.xlane.f32.xlu0 %v490
    %v492 = vpop.xlane.xlu0 %491
    %v493 = vrcp.pop %v489
    %v494 = vrcp.pop %v492
    %v495 = vmul.f32 %v484, %v493
    %v496 = vmul.f32 %v486, %v494
    %v497 = vpack.c.bf16 %v496, %v495
    %498 = vrot.lane.b32.xlu0 %v209, 72
    %v499 = vpop.permute.xlu0 %498
    %v502 = vsel %vm242, %v497, 0
    %504 = vmatpush.bf16.msra.mxu0 0
    %505 = vmatpush.bf16.msra.mxu0 0
    %506 = vmatpush.bf16.msra.mxu0 0
    %507 = vmatpush.bf16.msra.mxu0 0
    %508 = vmatpush.bf16.msra.mxu0 0
    %509 = vmatpush.bf16.msra.mxu0 0
    %510 = vmatpush.bf16.msra.mxu0 0
    %511 = vmatpush.bf16.msra.mxu0 %v499
    %512 = vmatmul.bf16.gmra.mxu0 %v502
    %v513 = vpop.f32.mrf.mxu0
    %v514 = vadd.f32 0.0, %v513
    %v515 = vpop.f32.mrf.mxu0
    %v516 = vadd.f32 0.0, %v515
    %517 = vdwg.mxu0
    %518 = vrot.lane.b32.xlu0 %v310, 104
    %v519 = vpop.permute.xlu0 %518
    %v521 = vsel %vm315, %v519, 0
    %523 = vmatpush.bf16.xpose.msra.mxu0 0
    %524 = vmatpush.bf16.xpose.msra.mxu0 0
    %525 = vmatpush.bf16.xpose.msra.mxu0 0
    %526 = vmatpush.bf16.xpose.msra.mxu0 0
    %527 = vmatpush.bf16.xpose.msra.mxu0 0
    %528 = vmatpush.bf16.xpose.msra.mxu0 0
    %529 = vmatpush.bf16.xpose.msra.mxu0 0
    %530 = vmatpush.bf16.xpose.msra.mxu0 %v455
    %531 = vmatmul.bf16.gmra.mxu0 %v521
    %v532 = vpop.f32.mrf.mxu0
    %v533 = vadd.f32 0.0, %v532
    %v534 = vpop.f32.mrf.mxu0
    %v535 = vadd.f32 0.0, %v534
    %536 = vdwg.mxu0
    %v537 = vmul.f32 %v533, 0.35355338
    %v538 = vmul.f32 %v535, 0.35355338
    %v539 = vadd.f32 %v537, %v308
    %v540 = vadd.f32 %v538, %v309
    %v541 = vsel %vm242, %v539, -inf
    %542 = vmax.xlane.f32.xlu0 %v541
    %v543 = vpop.xlane.xlu0 %542
    %v544 = vsel %vm242, %v540, -inf
    %545 = vmax.xlane.f32.xlu0 %v544
    %v546 = vpop.xlane.xlu0 %545
    %v547 = vsub.f32 %v539, %v543
    %v548 = vsub.f32 %v540, %v546
    %v549 = vmul.f32 %v547, 1.442695
    %v550 = vpow.pop %v549
    %v551 = vmul.f32 %v548, 1.442695
    %v552 = vpow.pop %v551
    %v553 = vsel %vm242, %v550, 0.0
    %554 = vadd.xlane.f32.xlu0 %v553
    %v555 = vpop.xlane.xlu0 %554
    %v556 = vsel %vm242, %v552, 0.0
    %557 = vadd.xlane.f32.xlu0 %v556
    %v558 = vpop.xlane.xlu0 %557
    %v559 = vrcp.pop %v555
    %v560 = vrcp.pop %v558
    %v561 = vmul.f32 %v550, %v559
    %v562 = vmul.f32 %v552, %v560
    %v563 = vpack.c.bf16 %v562, %v561
    %v565 = vsel %vm242, %v563, 0
    %567 = vmatpush.bf16.msra.mxu0 0
    %568 = vmatpush.bf16.msra.mxu0 0
    %569 = vmatpush.bf16.msra.mxu0 0
    %570 = vmatpush.bf16.msra.mxu0 0
    %571 = vmatpush.bf16.msra.mxu0 0
    %572 = vmatpush.bf16.msra.mxu0 0
    %573 = vmatpush.bf16.msra.mxu0 0
    %574 = vmatpush.bf16.msra.mxu0 %v499
    %575 = vmatmul.bf16.gmra.mxu0 %v565
    %v576 = vpop.f32.mrf.mxu0
    %v577 = vadd.f32 0.0, %v576
    %v578 = vpop.f32.mrf.mxu0
    %v579 = vadd.f32 0.0, %v578
    %580 = vdwg.mxu0
    %583 = vrot.lane.b32.xlu0 %v443, 8
    %v584 = vpop.permute.xlu0 %583
    %585 = vrot.lane.b32.xlu0 %v445, 8
    %v586 = vpop.permute.xlu0 %585
    %591 = vrot.lane.b32.xlu0 %v514, 16
    %v592 = vpop.permute.xlu0 %591
    %593 = vrot.lane.b32.xlu0 %v516, 16
    %v594 = vpop.permute.xlu0 %593
    %599 = vrot.lane.b32.xlu0 %v577, 24
    %v600 = vpop.permute.xlu0 %599
    %601 = vrot.lane.b32.xlu0 %v579, 24
    %v602 = vpop.permute.xlu0 %601
    %v605 = vsel %vm315, %v379, %v584
    %v606 = vsel %vm315, %v381, %v586
    %v607 = vsel %vm242, %v605, %v592
    %v608 = vsel %vm242, %v606, %v594
    %vm609 = vcmask 195584
    %v610 = vsel %vm609, %v607, %v600
    %v611 = vsel %vm609, %v608, %v602
    %v612 = vpack.c.bf16 %v611, %v610
    %v613 = vld [vmem:[#allocation8] sm:$0xf]
    %v614 = vld [vmem:[#allocation8 + $0x4] sm:$0xf]
    %v615 = vld [vmem:[#allocation8 + $0x8] sm:$0xf]
    %v616 = vld [vmem:[#allocation8 + $0xc] sm:$0xf]
    %v621 = vunpack.c.l.b16 %v613
    %v622 = vunpack.c.l.b16 %v614
    %v623 = vunpack.c.l.b16 %v615
    %v624 = vunpack.c.l.b16 %v616
    %v625 = vpack.c.b16 %v622, %v621
    %v626 = vpack.c.b16 %v624, %v623
    %v630 = vsel %vm124, %v612, 0
    %632 = vmatpush.bf16.msra.mxu0 0
    %633 = vmatpush.bf16.msra.mxu0 0
    %634 = vmatpush.bf16.msra.mxu0 0
    %635 = vmatpush.bf16.msra.mxu0 0
    %636 = vmatpush.bf16.msra.mxu0 0
    %637 = vmatpush.bf16.msra.mxu0 0
    %638 = vmatpush.bf16.msra.mxu0 %v626
    %639 = vmatpush.bf16.msra.mxu0 %v625
    %640 = vmatmul.bf16.gmra.mxu0 %v630
    %v641 = vpop.f32.mrf.mxu0
    %v642 = vadd.f32 0.0, %v641
    %v643 = vpop.f32.mrf.mxu0
    %v644 = vadd.f32 0.0, %v643
    %645 = vdwg.mxu0
    %v646 = vmul.f32 %v642, %v642
    %v647 = vmul.f32 %v644, %v644
    %v648 = vsel %vm124, %v646, 0.0
    %649 = vadd.xlane.f32.xlu0 %v648
    %v650 = vpop.xlane.xlu0 %649
    %v651 = vsel %vm124, %v647, 0.0
    %652 = vadd.xlane.f32.xlu0 %v651
    %v653 = vpop.xlane.xlu0 %652
    %v654 = vmul.f32 %v650, %v137
    %v655 = vmul.f32 %v653, %v137
    %v656 = vadd.f32 %v654, 1e-05
    %v657 = vadd.f32 %v655, 1e-05
    %v658 = vrsqrt.pop %v656
    %v659 = vmul.f32 %v658, %v656
    %v660 = vmul.f32 %v659, %v658
    %v661 = vmul.f32 0.5, %v660
    %v662 = vsub.f32 1.5, %v661
    %v663 = vmul.f32 %v658, %v662
    %vm664 = vweird.f32 %v656
    %vm665 = vweird.f32 %v658
    %vm666 = vmor %vm664, %vm665
    %v667 = vsel %vm666, %v658, %v663
    %v668 = vrsqrt.pop %v657
    %v669 = vmul.f32 %v668, %v657
    %v670 = vmul.f32 %v669, %v668
    %v671 = vmul.f32 0.5, %v670
    %v672 = vsub.f32 1.5, %v671
    %v673 = vmul.f32 %v668, %v672
    %vm674 = vweird.f32 %v657
    %vm675 = vweird.f32 %v668
    %vm676 = vmor %vm674, %vm675
    %v677 = vsel %vm676, %v668, %v673
    %v678 = vmul.f32 %v642, %v667
    %v679 = vmul.f32 %v644, %v677
    %v680 = vperm.slane %v121, 1
    %v681 = vmul.f32 %v678, %v680
    %v682 = vmul.f32 %v679, %v680
    %v683 = vadd.f32 %v119, %v681
    %v684 = vadd.f32 %v120, %v682
    %v685 = vmul.f32 %v683, %v683
    %v686 = vmul.f32 %v684, %v684
    %v687 = vsel %vm124, %v685, 0.0
    %688 = vadd.xlane.f32.xlu0 %v687
    %v689 = vpop.xlane.xlu0 %688
    %v690 = vsel %vm124, %v686, 0.0
    %691 = vadd.xlane.f32.xlu0 %v690
    %v692 = vpop.xlane.xlu0 %691
    %v693 = vmul.f32 %v689, %v137
    %v694 = vmul.f32 %v692, %v137
    %v695 = vadd.f32 %v693, 1e-05
    %v696 = vadd.f32 %v694, 1e-05
    %v697 = vrsqrt.pop %v695
    %v698 = vmul.f32 %v697, %v695
    %v699 = vmul.f32 %v698, %v697
    %v700 = vmul.f32 0.5, %v699
    %v701 = vsub.f32 1.5, %v700
    %v702 = vmul.f32 %v697, %v701
    %vm703 = vweird.f32 %v695
    %vm704 = vweird.f32 %v697
    %vm705 = vmor %vm703, %vm704
    %v706 = vsel %vm705, %v697, %v702
    %v707 = vrsqrt.pop %v696
    %v708 = vmul.f32 %v707, %v696
    %v709 = vmul.f32 %v708, %v707
    %v710 = vmul.f32 0.5, %v709
    %v711 = vsub.f32 1.5, %v710
    %v712 = vmul.f32 %v707, %v711
    %vm713 = vweird.f32 %v696
    %vm714 = vweird.f32 %v707
    %vm715 = vmor %vm713, %vm714
    %v716 = vsel %vm715, %v707, %v712
    %v717 = vmul.f32 %v683, %v706
    %v718 = vmul.f32 %v684, %v716
    %v719 = vperm.slane %v121, 2
    %v720 = vmul.f32 %v717, %v719
    %v721 = vmul.f32 %v718, %v719
    %v722 = vpack.c.bf16 %v721, %v720
    %v723 = vld [vmem:[#allocation10] sm:$0xf]
    %v724 = vld [vmem:[#allocation10 + $0x4] sm:$0xf]
    %v725 = vld [vmem:[#allocation10 + $0x8] sm:$0xf]
    %v726 = vld [vmem:[#allocation10 + $0xc] sm:$0xf]
    %v731 = vunpack.c.l.b16 %v723
    %v732 = vunpack.c.l.b16 %v724
    %v733 = vunpack.c.l.b16 %v725
    %v734 = vunpack.c.l.b16 %v726
    %v735 = vpack.c.b16 %v732, %v731
    %v736 = vpack.c.b16 %v734, %v733
    %v740 = vsel %vm124, %v722, 0
    %742 = vmatpush.bf16.msra.mxu0 0
    %743 = vmatpush.bf16.msra.mxu0 0
    %744 = vmatpush.bf16.msra.mxu0 0
    %745 = vmatpush.bf16.msra.mxu0 0
    %746 = vmatpush.bf16.msra.mxu0 0
    %747 = vmatpush.bf16.msra.mxu0 0
    %748 = vmatpush.bf16.msra.mxu0 %v736
    %749 = vmatpush.bf16.msra.mxu0 %v735
    %750 = vmatmul.bf16.gmra.mxu0 %v740
    %v751 = vpop.f32.mrf.mxu0
    %v752 = vadd.f32 0.0, %v751
    %v753 = vpop.f32.mrf.mxu0
    %v754 = vadd.f32 0.0, %v753
    %755 = vdwg.mxu0
    %v756 = vmul.f32 %v752, 0.5
    %v757 = vmul.f32 %v754, 0.5
    %v758 = vmul.f32 %v752, 0.044715
    %v759 = vmul.f32 %v754, 0.044715
    %v760 = vmul.f32 %v758, %v752
    %v761 = vmul.f32 %v759, %v754
    %v762 = vmul.f32 %v760, %v752
    %v763 = vmul.f32 %v761, %v754
    %v764 = vadd.f32 %v752, %v762
    %v765 = vadd.f32 %v754, %v763
    %v766 = vmul.f32 %v764, 0.7978846
    %v767 = vmul.f32 %v765, 0.7978846
    %v768 = vtanh.pop %v766
    %v769 = vtanh.pop %v767
    %v770 = vadd.f32 %v768, 1.0
    %v771 = vadd.f32 %v769, 1.0
    %v772 = vmul.f32 %v756, %v770
    %v773 = vmul.f32 %v757, %v771
    %776 = vrot.lane.b32.xlu0 %v752, 64
    %v777 = vpop.permute.xlu0 %776
    %778 = vrot.lane.b32.xlu0 %v754, 64
    %v779 = vpop.permute.xlu0 %778
    %v782 = vmul.f32 %v772, %v777
    %v783 = vmul.f32 %v773, %v779
    %v784 = vpack.c.bf16 %v783, %v782
    %v785 = vld [vmem:[%s9] sm:$0xf]
    %v786 = vld [vmem:[%s9 + $0x4] sm:$0xf]
    %v787 = vld [vmem:[%s9 + $0x8] sm:$0xf]
    %v788 = vld [vmem:[%s9 + $0xc] sm:$0xf]
    %v789 = vld [vmem:[%s9 + $0x10] sm:$0xf]
    %v790 = vld [vmem:[%s9 + $0x14] sm:$0xf]
    %v791 = vld [vmem:[%s9 + $0x18] sm:$0xf]
    %v792 = vld [vmem:[%s9 + $0x1c] sm:$0xf]
    %v801 = vunpack.c.l.b16 %v785
    %v802 = vunpack.c.l.b16 %v786
    %v803 = vunpack.c.l.b16 %v787
    %v804 = vunpack.c.l.b16 %v788
    %v805 = vunpack.c.l.b16 %v789
    %v806 = vunpack.c.l.b16 %v790
    %v807 = vunpack.c.l.b16 %v791
    %v808 = vunpack.c.l.b16 %v792
    %v809 = vpack.c.b16 %v802, %v801
    %v810 = vpack.c.b16 %v804, %v803
    %v811 = vpack.c.b16 %v806, %v805
    %v812 = vpack.c.b16 %v808, %v807
    %vm817 = vcmask 523264
    %v819 = vsel %vm817, %v784, 0
    %821 = vmatpush.bf16.msra.mxu0 0
    %822 = vmatpush.bf16.msra.mxu0 0
    %823 = vmatpush.bf16.msra.mxu0 0
    %824 = vmatpush.bf16.msra.mxu0 0
    %825 = vmatpush.bf16.msra.mxu0 %v812
    %826 = vmatpush.bf16.msra.mxu0 %v811
    %827 = vmatpush.bf16.msra.mxu0 %v810
    %828 = vmatpush.bf16.msra.mxu0 %v809
    %829 = vmatmul.bf16.gmra.mxu0 %v819
    %v830 = vpop.f32.mrf.mxu0
    %v831 = vadd.f32 0.0, %v830
    %v832 = vpop.f32.mrf.mxu0
    %v833 = vadd.f32 0.0, %v832
    %834 = vdwg.mxu0
    %v835 = vmul.f32 %v831, %v831
    %v836 = vmul.f32 %v833, %v833
    %v837 = vsel %vm124, %v835, 0.0
    %838 = vadd.xlane.f32.xlu0 %v837
    %v839 = vpop.xlane.xlu0 %838
    %v840 = vsel %vm124, %v836, 0.0
    %841 = vadd.xlane.f32.xlu0 %v840
    %v842 = vpop.xlane.xlu0 %841
    %v843 = vmul.f32 %v839, %v137
    %v844 = vmul.f32 %v842, %v137
    %v845 = vadd.f32 %v843, 1e-05
    %v846 = vadd.f32 %v844, 1e-05
    %v847 = vrsqrt.pop %v845
    %v848 = vmul.f32 %v847, %v845
    %v849 = vmul.f32 %v848, %v847
    %v850 = vmul.f32 0.5, %v849
    %v851 = vsub.f32 1.5, %v850
    %v852 = vmul.f32 %v847, %v851
    %vm853 = vweird.f32 %v845
    %vm854 = vweird.f32 %v847
    %vm855 = vmor %vm853, %vm854
    %v856 = vsel %vm855, %v847, %v852
    %v857 = vrsqrt.pop %v846
    %v858 = vmul.f32 %v857, %v846
    %v859 = vmul.f32 %v858, %v857
    %v860 = vmul.f32 0.5, %v859
    %v861 = vsub.f32 1.5, %v860
    %v862 = vmul.f32 %v857, %v861
    %vm863 = vweird.f32 %v846
    %vm864 = vweird.f32 %v857
    %vm865 = vmor %vm863, %vm864
    %v866 = vsel %vm865, %v857, %v862
    %v867 = vmul.f32 %v831, %v856
    %v868 = vmul.f32 %v833, %v866
    %v869 = vperm.slane %v121, 3
    %v870 = vmul.f32 %v867, %v869
    %v871 = vmul.f32 %v868, %v869
    %v872 = vadd.f32 %v683, %v870
    %v873 = vadd.f32 %v684, %v871
    %874 = vst.msk [vmem:[#allocation11] sm:$0xff] %vm124, %v872
    %875 = vst.msk [vmem:[#allocation11 + $0x8] sm:$0xff] %vm124, %v873
    // Predicated region
    $region62: #{tpu_custom_call.1} parent=1 // pred_check
      _
    $region63: #{tpu_custom_call.1} parent=1 // pred_check_branch
      %877 = sbr.rel (0) target = $region65
    $region64: #{tpu_custom_call.1} parent=1 // pred_region
      %879 = vsyncadd [#allocation4], 0
      %s880 = sshll.u32 [#allocation11], 4
      %s881 = int_to_ptr.vmem [resolvable:$true] %s880
      %s882 = sshll.u32 %s10, 4
      %s883 = int_to_ptr.hbm [resolvable:$true] %s882
      %888 = dma.vmem_to_hbm [thread:$0]  %s881, 256, %s883, [#allocation4], 128, 128, 8
    $region65: #{tpu_custom_call.1} parent=1 // pred_fallthru
      _
    // Predicated region
    $region66: #{tpu_custom_call.1} parent=1 // pred_check
      _
    $region67: #{tpu_custom_call.1} parent=1 // pred_check_branch
      %890 = sbr.rel (0) target = $region69
    $region68: #{tpu_custom_call.1} parent=1 // pred_region
      %892 = vsyncadd [#allocation13], 0
      %s893 = sshll.u32 [#allocation12], 4
      %s894 = int_to_ptr.vmem [resolvable:$true] %s893
      %s895 = sshll.u32 %s11, 4
      %s896 = int_to_ptr.hbm [resolvable:$true] %s895
      %901 = dma.vmem_to_hbm [thread:$0]  %s894, 256, %s896, [#allocation13], 128, 128, 8
    $region69: #{tpu_custom_call.1} parent=1 // pred_fallthru
      _
    // Predicated region
    $region70: #{tpu_custom_call.1} parent=1 // pred_check
      _
    $region71: #{tpu_custom_call.1} parent=1 // pred_check_branch
      %903 = sbr.rel (0) target = $region73
    $region72: #{tpu_custom_call.1} parent=1 // pred_region
      %905 = vsyncadd [#allocation13], 0
      %s906 = sshll.u32 [#allocation14], 4
      %s907 = int_to_ptr.vmem [resolvable:$true] %s906
      %s908 = sshll.u32 %s12, 4
      %s909 = int_to_ptr.hbm [resolvable:$true] %s908
      %914 = dma.vmem_to_hbm [thread:$0]  %s907, 256, %s909, [#allocation13], 128, 128, 8
    $region73: #{tpu_custom_call.1} parent=1 // pred_fallthru
      _
    // Predicated region
    $region74: #{tpu_custom_call.1} parent=1 // pred_check
      _
    $region75: #{tpu_custom_call.1} parent=1 // pred_check_branch
      %916 = sbr.rel (0) target = $region77
    $region76: #{tpu_custom_call.1} parent=1 // pred_region
      %918 = dma.done [#allocation4], 256
    $region77: #{tpu_custom_call.1} parent=1 // pred_fallthru
      _
    // Predicated region
    $region78: #{tpu_custom_call.1} parent=1 // pred_check
      _
    $region79: #{tpu_custom_call.1} parent=1 // pred_check_branch
      %920 = sbr.rel (0) target = $region81
    $region80: #{tpu_custom_call.1} parent=1 // pred_region
      %922 = dma.done [#allocation13], 256
    $region81: #{tpu_custom_call.1} parent=1 // pred_fallthru
      _
    // Predicated region
    $region82: #{tpu_custom_call.1} parent=1 // pred_check
      _
    $region83: #{tpu_custom_call.1} parent=1 // pred_check_branch
      %924 = sbr.rel (0) target = $region85
    $region84: #{tpu_custom_call.1} parent=1 // pred_region
      %926 = dma.done [#allocation13], 256
    $region85: #{tpu_custom_call.1} parent=1 // pred_fallthru
      _
    %927 = vsyncpa [#allocation3], 1
    %928 = vsyncpa [#allocation6], 1
    %929 = vsyncpa [#allocation9], 1
    %930 = vsyncpa [#allocation4], 1
    %931 = vsyncpa [#allocation13], 1

</llo_original>
